<compile_context>
chip_gen: v7x
topology: tpu7x:2x2x1
jax: 0.10.0
libtpu: 0.0.40
codegen_flags: <defaults>
</compile_context>

<pallas_src>
import functools

import jax
import jax.numpy as jnp
from jax.experimental import pallas as pl
from jax.experimental.pallas import tpu as pltpu


def _matmul_bias_relu_kernel(x_ref, w_ref, b_ref, o_ref, *, chunk_rows):
    # x_ref: (TM, K)       bf16 im2col activations (K = 27*Cin)
    # w_ref: (K, CO_PAD)   bf16 folded weights (Cout zero-padded to lane width)
    # b_ref: (1, CO_PAD)   f32  bias (zero-padded)
    # o_ref: (TM, CO_PAD)  f32  output tile (lane dense)
    n_chunks = o_ref.shape[0] // chunk_rows
    w = w_ref[...]          # hoisted: resident across chunks
    b = b_ref[...]

    def body(c, carry):
        r0 = pl.multiple_of(c * chunk_rows, chunk_rows)
        rows = pl.ds(r0, chunk_rows)
        acc = jnp.dot(x_ref[rows, :], w, preferred_element_type=jnp.float32)
        o_ref[rows, :] = jnp.maximum(acc + b, 0.0).astype(o_ref.dtype)
        return carry

    jax.lax.fori_loop(0, n_chunks, body, None, unroll=True)


def single_conv_forward(x_ncdhw, weight_oidhw, bias, *,
                        tile_m=256, chunk_rows=128,
                        compute_dtype=jnp.bfloat16):
    """Forward of single_conv. x: (N,Cin,D,H,W), weight: (Cout,Cin,3,3,3), bias: (Cout,)."""
    N, Cin, D, H, W = x_ncdhw.shape
    Cout = weight_oidhw.shape[0]
    assert tile_m % chunk_rows == 0

    K = 27 * Cin
    CO_PAD = 128 * pl.cdiv(Cout, 128)          # lane-dense output width
    M = N * D * H * W
    M_PAD = tile_m * pl.cdiv(M, tile_m)

    # ---- wrapper glue: channels-last, zero halo, im2col (tap-major, Cin innermost) ----
    x = jnp.transpose(x_ncdhw, (0, 2, 3, 4, 1))                    # (N,D,H,W,Cin)
    xp = jnp.pad(x, ((0, 0), (1, 1), (1, 1), (1, 1), (0, 0)))      # 1-voxel halo
    taps = [xp[:, kd:kd + D, kh:kh + H, kw:kw + W, :]
            for kd in range(3) for kh in range(3) for kw in range(3)]
    x_col = jnp.concatenate(taps, axis=-1).reshape(M, K)           # (M, 27*Cin)
    if M_PAD != M:
        x_col = jnp.pad(x_col, ((0, M_PAD - M), (0, 0)))
    x_col = x_col.astype(compute_dtype)

    # weights: (Cout,Cin,3,3,3) -> (kd,kh,kw,Cin,Cout) -> (27*Cin, Cout), pad Cout.
    w_col = jnp.transpose(weight_oidhw, (2, 3, 4, 1, 0)).reshape(K, Cout)
    w_col = jnp.pad(w_col, ((0, 0), (0, CO_PAD - Cout))).astype(compute_dtype)
    b_col = jnp.pad(bias.astype(jnp.float32), (0, CO_PAD - Cout)).reshape(1, CO_PAD)

    kernel = functools.partial(_matmul_bias_relu_kernel, chunk_rows=chunk_rows)

    out = pl.pallas_call(
        kernel,
        out_shape=jax.ShapeDtypeStruct((M_PAD, CO_PAD), jnp.float32),
        grid=(M_PAD // tile_m,),
        in_specs=[
            pl.BlockSpec((tile_m, K), lambda i: (i, 0)),
            pl.BlockSpec((K, CO_PAD), lambda i: (0, 0)),
            pl.BlockSpec((1, CO_PAD), lambda i: (0, 0)),
        ],
        out_specs=pl.BlockSpec((tile_m, CO_PAD), lambda i: (i, 0)),
        compiler_params=pltpu.CompilerParams(
            dimension_semantics=("parallel",),
            vmem_limit_bytes=32 * 1024 * 1024),
    )(x_col, w_col, b_col)

    # Slice off padding, back to PyTorch NCDHW convention.
    out = out[:M, :Cout].reshape(N, D, H, W, Cout)
    return jnp.transpose(out, (0, 4, 1, 2, 3)).astype(x_ncdhw.dtype)


if __name__ == "__main__":
    key = jax.random.PRNGKey(0)
    k_x, k_w, k_b = jax.random.split(key, 3)

    # Small shapes consistent with nn.Conv3d(in_ch, out_ch, 3, padding=1).
    N, Cin, Cout = 2, 4, 8
    D, H, W = 8, 8, 8

    x = jax.random.normal(k_x, (N, Cin, D, H, W), jnp.float32)
    # Deterministic init mimicking PyTorch's default uniform(-1/sqrt(fan_in), +...).
    fan_in = Cin * 3 * 3 * 3
    bound = 1.0 / (fan_in ** 0.5)
    w = jax.random.uniform(k_w, (Cout, Cin, 3, 3, 3), jnp.float32, -bound, bound)
    b = jax.random.uniform(k_b, (Cout,), jnp.float32, -bound, bound)

    y = jax.block_until_ready(single_conv_forward(x, w, b))

    # Reference check with XLA's conv (same semantics as nn.Conv3d + ReLU).
    ref = jax.lax.conv_general_dilated(
        x, w, window_strides=(1, 1, 1), padding="SAME",
        dimension_numbers=("NCDHW", "OIDHW", "NCDHW"))
    ref = jnp.maximum(ref + b.reshape(1, Cout, 1, 1, 1), 0.0)
    assert y.shape == (N, Cout, D, H, W)
    # bf16 MXU inputs (f32 accumulation) vs the full-f32 XLA reference.
    assert jnp.allclose(y, ref, atol=3e-2, rtol=3e-2), "mismatch vs reference conv3d"

    print("KERNEL_OK")
</pallas_src>

<mosaic_0001>
module attributes {stable_mosaic.version = 11 : i64} {
  func.func @_matmul_bias_relu_kernel(%arg0: i32, %arg1: memref<256x108xbf16, #tpu.memory_space<vmem>>, %arg2: memref<108x128xbf16, #tpu.memory_space<vmem>>, %arg3: memref<1x128xf32, #tpu.memory_space<vmem>>, %arg4: memref<256x128xf32, #tpu.memory_space<vmem>>) attributes {dimension_semantics = [#tpu.dimension_semantics<parallel>], iteration_bounds = array<i64: 4>, scalar_prefetch = 0 : i64, scratch_operands = 0 : i64, tpu.core_type = #tpu.core_type<tc>, window_params = [{transform_indices = @transform_0, window_bounds = array<i64: 256, 108>}, {pipeline_mode = #tpu.pipeline_mode<synchronous>, transform_indices = @transform_1, window_bounds = array<i64: 108, 128>}, {pipeline_mode = #tpu.pipeline_mode<synchronous>, transform_indices = @transform_2, window_bounds = array<i64: 1, 128>}, {transform_indices = @transform_3, window_bounds = array<i64: 256, 128>}]} {
    %c0 = arith.constant 0 : index
    %c0_0 = arith.constant 0 : index
    %0 = vector.load %arg2[%c0, %c0_0] : memref<108x128xbf16, #tpu.memory_space<vmem>>, vector<108x128xbf16>
    %c0_1 = arith.constant 0 : index
    %c0_2 = arith.constant 0 : index
    %1 = vector.load %arg3[%c0_1, %c0_2] : memref<1x128xf32, #tpu.memory_space<vmem>>, vector<1x128xf32>
    %c0_i32 = arith.constant 0 : i32
    %c128_i32 = arith.constant 128 : i32
    %2 = arith.muli %c0_i32, %c128_i32 : i32
    %3 = tpu.assume_multiple %2, 128 : i32
    %4 = arith.index_cast %3 : i32 to index
    %c0_3 = arith.constant 0 : index
    %5 = vector.load %arg1[%4, %c0_3] : memref<256x108xbf16, #tpu.memory_space<vmem>>, vector<128x108xbf16>
    %cst = arith.constant dense<0.000000e+00> : vector<128x128xf32>
    %6 = tpu.matmul %5, %0, %cst {dimension_numbers = #tpu.dot_dimension_numbers<[1], [0], [0], [1], [0, 0, 1, 1], [], []>} : vector<128x108xbf16>, vector<108x128xbf16>, vector<128x128xf32> -> vector<128x128xf32>
    %7 = vector.broadcast %1 : vector<1x128xf32> to vector<128x128xf32>
    %8 = arith.addf %6, %7 : vector<128x128xf32>
    %cst_4 = arith.constant 0.000000e+00 : f32
    %9 = vector.broadcast %cst_4 : f32 to vector<128x128xf32>
    %10 = arith.maximumf %8, %9 : vector<128x128xf32>
    %11 = arith.index_cast %3 : i32 to index
    %c0_5 = arith.constant 0 : index
    %12 = vector.load %arg4[%11, %c0_5] : memref<256x128xf32, #tpu.memory_space<vmem>>, vector<128x128xf32>
    tpu.vector_store %arg4[%11, %c0_5], %10 {strides = array<i32>} : memref<256x128xf32, #tpu.memory_space<vmem>>, vector<128x128xf32>,
    %c1_i32 = arith.constant 1 : i32
    %c128_i32_6 = arith.constant 128 : i32
    %13 = arith.muli %c1_i32, %c128_i32_6 : i32
    %14 = tpu.assume_multiple %13, 128 : i32
    %15 = arith.index_cast %14 : i32 to index
    %c0_7 = arith.constant 0 : index
    %16 = vector.load %arg1[%15, %c0_7] : memref<256x108xbf16, #tpu.memory_space<vmem>>, vector<128x108xbf16>
    %cst_8 = arith.constant dense<0.000000e+00> : vector<128x128xf32>
    %17 = tpu.matmul %16, %0, %cst_8 {dimension_numbers = #tpu.dot_dimension_numbers<[1], [0], [0], [1], [0, 0, 1, 1], [], []>} : vector<128x108xbf16>, vector<108x128xbf16>, vector<128x128xf32> -> vector<128x128xf32>
    %18 = vector.broadcast %1 : vector<1x128xf32> to vector<128x128xf32>
    %19 = arith.addf %17, %18 : vector<128x128xf32>
    %cst_9 = arith.constant 0.000000e+00 : f32
    %20 = vector.broadcast %cst_9 : f32 to vector<128x128xf32>
    %21 = arith.maximumf %19, %20 : vector<128x128xf32>
    %22 = arith.index_cast %14 : i32 to index
    %c0_10 = arith.constant 0 : index
    %23 = vector.load %arg4[%22, %c0_10] : memref<256x128xf32, #tpu.memory_space<vmem>>, vector<128x128xf32>
    tpu.vector_store %arg4[%22, %c0_10], %21 {strides = array<i32>} : memref<256x128xf32, #tpu.memory_space<vmem>>, vector<128x128xf32>,
    %c2_i32 = arith.constant 2 : i32
    return
  }
  func.func @transform_0(%arg0: i32) -> (i32, i32) {
    %c0_i32 = arith.constant 0 : i32
    %c0_i32_0 = arith.constant 0 : i32
    return %arg0, %c0_i32 : i32, i32
  }
  func.func @transform_1(%arg0: i32) -> (i32, i32) {
    %c0_i32 = arith.constant 0 : i32
    %c0_i32_0 = arith.constant 0 : i32
    %c0_i32_1 = arith.constant 0 : i32
    return %c0_i32, %c0_i32_0 : i32, i32
  }
  func.func @transform_2(%arg0: i32) -> (i32, i32) {
    %c0_i32 = arith.constant 0 : i32
    %c0_i32_0 = arith.constant 0 : i32
    %c0_i32_1 = arith.constant 0 : i32
    return %c0_i32, %c0_i32_0 : i32, i32
  }
  func.func @transform_3(%arg0: i32) -> (i32, i32) {
    %c0_i32 = arith.constant 0 : i32
    %c0_i32_0 = arith.constant 0 : i32
    return %arg0, %c0_i32 : i32, i32
  }
}

</mosaic_0001>

<llo_original>
// kernel: tpu_custom_call.1
$region0: #{tpu_custom_call.1}
  #allocation0 [shape = 'u32[]', space=smem, size = 0x4, offset = 0x4, fixed_abs, tag = 'smem constant byte address 0x4 - core index']
  #allocation1 [shape = 'u32[144,128]{1,0:T(1,128)}', space=vmem, size = 0x12000, scoped, tag = 'internal scratch']
  %s0 = inlined_call_operand.vmem [shape: bf16[1024,108], index: 0, kind: input, shape index: {}]
  %s1 = inlined_call_operand.vmem [shape: bf16[108,128], index: 1, kind: input, shape index: {}]
  %s2 = inlined_call_operand.vmem [shape: f32[1,128], index: 2, kind: input, shape index: {}]
  %s3 = inlined_call_operand.hbm [shape: f32[1024,128], index: 3, kind: output, shape index: {}]
  %s4 = sld [smem:[#allocation0]]
  $region45: #{tpu_custom_call.1} parent=0
    _
  %s6 = ssub.s32 1, %s4
  %s7 = scalar_select 0, %s6, %s4
  $region1: #{tpu_custom_call.1} parent=0
    #allocation2 [shape = 'u8[262144]{0}', space=vmem, size = 0x40000, scoped, tag = 'output window, operand 0']
    #allocation3 [shape = 's32[2]{0}', space=sflag, size = 0x8, scoped, tag = 'scoped memory for tpu_custom_call.1']
    %8 = vsyncpa [#allocation3], 0
    %s9 = scalar_lea.sflag [#allocation3], 1
    %10 = vsyncpa %s9, 0
    loop: start=0, step=1, limit=6
    $region2: #{tpu_custom_call.1} parent=1 // loop_pre_header
      _
    $region3: #{tpu_custom_call.1} parent=1 // loop_header
      %s12 = sphi 0, %s16
      %p13 = scmp.ge.s32.totalorder %s12, 6
      %s22 = sphi 0, %s24
      %s25 = sphi 0, %s22
      %s26 = sphi 0, %s25
      %s42 = sphi 0, %s26
      %s46 = sphi 0, %s46
      %s48 = sphi 0, %s46
      %s49 = sphi 0, %s48
      %s63 = sphi 0, %s49
      %s67 = sphi 0, %s67
      %s69 = sphi 0, %s67
      %s70 = sphi 0, %s69
      %s84 = sphi 0, %s70
      %s90 = sphi 0, %s92
      %s93 = sphi 0, %s90
      %s94 = sphi 0, %s93
      %s110 = sphi 0, %s94
    $region4: #{tpu_custom_call.1} parent=1 // loop_header_branch
      %15 = sbr.rel (%p13) target = $region8
    $region5: #{tpu_custom_call.1} parent=1 // loop_body
      %s17 = ssub.s32 %s12, 1
      %s18 = ssub.s32 %s12, 2
      %s19 = sadd.s32 %s12, 1
      %s20 = ssub.s32 %s12, %s19
      %p21 = scmp.eq.s32.totalorder %s20, 0
      %s23 = sadd.s32 %s22, 1
      %s24 = scalar_select %p21, %s22, %s23
      %p27 = pneg %p21
      %p28 = scmp.eq.s32.totalorder %s12, 3
      %p29 = por %p27, %p28
      %p30 = scmp.ne.s32.totalorder %s22, %s25
      %p31 = scmp.eq.s32.totalorder %s12, 0
      %p32 = por %p30, %p31
      %p33 = scmp.ne.s32.totalorder %s22, %s25
      %p34 = scmp.eq.s32.totalorder %s17, 3
      %p35 = por %p33, %p34
      %p36 = scmp.ne.s32.totalorder %s25, %s26
      %p37 = scmp.eq.s32.totalorder %s17, 0
      %p38 = por %p36, %p37
      %p39 = scmp.ne.s32.totalorder %s25, %s26
      %p40 = scmp.eq.s32.totalorder %s18, 3
      %p41 = por %p39, %p40
      %p43 = scmp.ne.s32.totalorder %s26, %s42
      %p44 = scmp.eq.s32.totalorder %s18, 0
      %p45 = por %p43, %p44
      %s47 = sadd.s32 %s46, 1
      %p50 = scmp.eq.s32.totalorder %s12, 3
      %p51 = scmp.ne.s32.totalorder %s46, %s48
      %p52 = scmp.eq.s32.totalorder %s12, 0
      %p53 = por %p51, %p52
      %p54 = scmp.ne.s32.totalorder %s46, %s48
      %p55 = scmp.eq.s32.totalorder %s17, 3
      %p56 = por %p54, %p55
      %p57 = scmp.ne.s32.totalorder %s48, %s49
      %p58 = scmp.eq.s32.totalorder %s17, 0
      %p59 = por %p57, %p58
      %p60 = scmp.ne.s32.totalorder %s48, %s49
      %p61 = scmp.eq.s32.totalorder %s18, 3
      %p62 = por %p60, %p61
      %p64 = scmp.ne.s32.totalorder %s49, %s63
      %p65 = scmp.eq.s32.totalorder %s18, 0
      %p66 = por %p64, %p65
      %s68 = sadd.s32 %s67, 1
      %p71 = scmp.eq.s32.totalorder %s12, 3
      %p72 = scmp.ne.s32.totalorder %s67, %s69
      %p73 = scmp.eq.s32.totalorder %s12, 0
      %p74 = por %p72, %p73
      %p75 = scmp.ne.s32.totalorder %s67, %s69
      %p76 = scmp.eq.s32.totalorder %s17, 3
      %p77 = por %p75, %p76
      %p78 = scmp.ne.s32.totalorder %s69, %s70
      %p79 = scmp.eq.s32.totalorder %s17, 0
      %p80 = por %p78, %p79
      %p81 = scmp.ne.s32.totalorder %s69, %s70
      %p82 = scmp.eq.s32.totalorder %s18, 3
      %p83 = por %p81, %p82
      %p85 = scmp.ne.s32.totalorder %s70, %s84
      %p86 = scmp.eq.s32.totalorder %s18, 0
      %p87 = por %p85, %p86
      %s88 = ssub.s32 %s12, %s19
      %p89 = scmp.eq.s32.totalorder %s88, 0
      %s91 = sadd.s32 %s90, 1
      %s92 = scalar_select %p89, %s90, %s91
      %p95 = pneg %p89
      %p96 = scmp.eq.s32.totalorder %s12, 3
      %p97 = por %p95, %p96
      %p98 = scmp.ne.s32.totalorder %s90, %s93
      %p99 = scmp.eq.s32.totalorder %s12, 0
      %p100 = por %p98, %p99
      %p101 = scmp.ne.s32.totalorder %s90, %s93
      %p102 = scmp.eq.s32.totalorder %s17, 3
      %p103 = por %p101, %p102
      %p104 = scmp.ne.s32.totalorder %s93, %s94
      %p105 = scmp.eq.s32.totalorder %s17, 0
      %p106 = por %p104, %p105
      %p107 = scmp.ne.s32.totalorder %s93, %s94
      %p108 = scmp.eq.s32.totalorder %s18, 3
      %p109 = por %p107, %p108
      %p111 = scmp.ne.s32.totalorder %s94, %s110
      %p112 = scmp.eq.s32.totalorder %s18, 0
      %p113 = por %p111, %p112
      %p114 = scmp.le.s32.totalorder 1, %s12
      %p115 = scmp.lt.s32.totalorder %s12, 5
      %p116 = pnand %p114, %p115
      %p117 = pneg %p116
      // Predicated region
      $region9: #{tpu_custom_call.1} parent=5 // pred_check
        _
      $region10: #{tpu_custom_call.1} parent=5 // pred_check_branch
        %119 = sbr.rel (%p116) target = $region12
      $region11: #{tpu_custom_call.1} parent=5 // pred_region
        %s120 = ssub.s32 %s12, 1
        // Predicated region
        $region13: #{tpu_custom_call.1} parent=11 // pred_check
          %p121 = pneg %p59
        $region14: #{tpu_custom_call.1} parent=11 // pred_check_branch
          %123 = sbr.rel (%p121) target = $region16
        $region15: #{tpu_custom_call.1} parent=11 // pred_region
          _
        $region16: #{tpu_custom_call.1} parent=11 // pred_fallthru
          _
        // Predicated region
        $region17: #{tpu_custom_call.1} parent=11 // pred_check
          %p124 = pneg %p80
        $region18: #{tpu_custom_call.1} parent=11 // pred_check_branch
          %126 = sbr.rel (%p124) target = $region20
        $region19: #{tpu_custom_call.1} parent=11 // pred_region
          _
        $region20: #{tpu_custom_call.1} parent=11 // pred_fallthru
          _
      $region12: #{tpu_custom_call.1} parent=5 // pred_fallthru
        _
      %p127 = scmp.lt.s32.totalorder %s12, 4
      // Predicated region
      $region21: #{tpu_custom_call.1} parent=5 // pred_check
        %p128 = pneg %p127
      $region22: #{tpu_custom_call.1} parent=5 // pred_check_branch
        %130 = sbr.rel (%p128) target = $region24
      $region23: #{tpu_custom_call.1} parent=5 // pred_region
        // Predicated region
        $region25: #{tpu_custom_call.1} parent=23 // pred_check
          %p131 = pneg %p32
        $region26: #{tpu_custom_call.1} parent=23 // pred_check_branch
          %133 = sbr.rel (%p131) target = $region28
        $region27: #{tpu_custom_call.1} parent=23 // pred_region
          %s134 = smul.u32 32, %s12
          %p135 = scmp.lt.s32.totalorder %s134, 127
          %s136 = scalar_select %p135, %s134, 127
          %s137 = smul.addr %s136, 4
          %s138 = scalar_lea.vmem %s0, %s137
          %s139 = smul.u32 32, %s12
        $region28: #{tpu_custom_call.1} parent=23 // pred_fallthru
          _
      $region24: #{tpu_custom_call.1} parent=5 // pred_fallthru
        _
      %p140 = scmp.le.s32.totalorder 1, %s12
      %p141 = scmp.lt.s32.totalorder %s12, 5
      %p142 = pnand %p140, %p141
      %p143 = pneg %p142
      // Predicated region
      $region29: #{tpu_custom_call.1} parent=5 // pred_check
        _
      $region30: #{tpu_custom_call.1} parent=5 // pred_check_branch
        %145 = sbr.rel (%p142) target = $region32
      $region31: #{tpu_custom_call.1} parent=5 // pred_region
        %s146 = ssub.s32 %s12, 1
        %s147 = smul.u32 32, %s17
        %p148 = scmp.lt.s32.totalorder %s147, 127
        %s149 = scalar_select %p148, %s147, 127
        %s150 = smul.addr %s149, 4
        %s151 = scalar_lea.vmem %s0, %s150
        %p152 = pneg %p38
        %p153 = pneg %p35
        %p154 = pneg %p59
        %p155 = pneg %p56
        %p156 = pneg %p80
        %p157 = pneg %p77
        %p158 = pneg %p106
        %p159 = pneg %p103
        %s160 = sand.u32 %s93, 1
        %s161 = scalar_lea.sflag [#allocation3], %s160
        %s162 = sand.u32 %s93, 1
        %s163 = smul.addr %s162, 256
        %s164 = scalar_lea.vmem [#allocation2], %s163
        %s165 = smul.u32 32, %s17
        %p166 = scmp.lt.s32.totalorder %s165, 127
        %s167 = scalar_select %p166, %s165, 127
        %s168 = smul.addr %s167, 4
        %s169 = scalar_lea.vmem %s0, %s168
        %s170 = smul.u32 32, %s17
        %s171 = smul.u32 32, %s17
        %v173 = vld [vmem:[%s1] sm:$0xf]
        %v174 = vld [vmem:[%s1 + $0x4] sm:$0xf]
        %v175 = vld [vmem:[%s1 + $0x8] sm:$0xf]
        %v176 = vld [vmem:[%s1 + $0xc] sm:$0xf]
        %v177 = vld [vmem:[%s1 + $0x10] sm:$0xf]
        %v178 = vld [vmem:[%s1 + $0x14] sm:$0xf]
        %v179 = vld [vmem:[%s1 + $0x18] sm:$0xf]
        %v180 = vld [vmem:[%s1 + $0x1c] sm:$0xf]
        %v181 = vld [vmem:[%s1 + $0x20] sm:$0xf]
        %v182 = vld [vmem:[%s1 + $0x24] sm:$0xf]
        %v183 = vld [vmem:[%s1 + $0x28] sm:$0xf]
        %v184 = vld [vmem:[%s1 + $0x2c] sm:$0xf]
        %v185 = vld [vmem:[%s1 + $0x30] sm:$0xf]
        %v186 = vld [vmem:[%s1 + $0x34] sm:$0x3]
        %v187 = vld [vmem:[%s2] sm:$0x1]
        %v188 = vld [vmem:[%s169] sm:$0xf]
        %v189 = vld [vmem:[%s169 + $0x4] sm:$0xf]
        %v190 = vld [vmem:[%s169 + $0x8] sm:$0xf]
        %v191 = vld [vmem:[%s169 + $0xc] sm:$0xf]
        %v192 = vld [vmem:[%s169 + $0x10] sm:$0xf]
        %v193 = vld [vmem:[%s169 + $0x14] sm:$0xf]
        %v194 = vld [vmem:[%s169 + $0x18] sm:$0xf]
        %v195 = vld [vmem:[%s169 + $0x1c] sm:$0xf]
        %v196 = vld [vmem:[%s169 + $0x20] sm:$0xf]
        %v197 = vld [vmem:[%s169 + $0x24] sm:$0xf]
        %v198 = vld [vmem:[%s169 + $0x28] sm:$0xf]
        %v199 = vld [vmem:[%s169 + $0x2c] sm:$0xf]
        %v200 = vld [vmem:[%s169 + $0x30] sm:$0xf]
        %v201 = vld [vmem:[%s169 + $0x34] sm:$0xf]
        %v202 = vld [vmem:[%s169 + $0x38] sm:$0xf]
        %v203 = vld [vmem:[%s169 + $0x3c] sm:$0xf]
        %v205 = vlaneseq
        %v206 = vshrl.u32 %v205, 7
        %v207 = vsub.s32 0, %v206
        %v208 = vrot.slane %v187, %v207
        %v226 = vunpack.c.l.b16 %v188
        %v227 = vunpack.c.l.b16 %v189
        %v228 = vunpack.c.l.b16 %v190
        %v229 = vunpack.c.l.b16 %v191
        %v230 = vunpack.c.l.b16 %v192
        %v231 = vunpack.c.l.b16 %v193
        %v232 = vunpack.c.l.b16 %v194
        %v233 = vunpack.c.l.b16 %v195
        %v234 = vunpack.c.l.b16 %v196
        %v235 = vunpack.c.l.b16 %v197
        %v236 = vunpack.c.l.b16 %v198
        %v237 = vunpack.c.l.b16 %v199
        %v238 = vunpack.c.l.b16 %v200
        %v239 = vunpack.c.l.b16 %v201
        %v240 = vunpack.c.l.b16 %v202
        %v241 = vunpack.c.l.b16 %v203
        %v242 = vpack.c.b16 %v227, %v226
        %v243 = vpack.c.b16 %v229, %v228
        %v244 = vpack.c.b16 %v231, %v230
        %v245 = vpack.c.b16 %v233, %v232
        %v246 = vpack.c.b16 %v235, %v234
        %v247 = vpack.c.b16 %v237, %v236
        %v248 = vpack.c.b16 %v239, %v238
        %v249 = vpack.c.b16 %v241, %v240
        %v264 = vunpack.c.l.b16 %v173
        %v265 = vunpack.c.l.b16 %v174
        %v266 = vunpack.c.l.b16 %v175
        %v267 = vunpack.c.l.b16 %v176
        %v268 = vunpack.c.l.b16 %v177
        %v269 = vunpack.c.l.b16 %v178
        %v270 = vunpack.c.l.b16 %v179
        %v271 = vunpack.c.l.b16 %v180
        %v272 = vunpack.c.l.b16 %v181
        %v273 = vunpack.c.l.b16 %v182
        %v274 = vunpack.c.l.b16 %v183
        %v275 = vunpack.c.l.b16 %v184
        %v276 = vunpack.c.l.b16 %v185
        %v277 = vunpack.c.l.b16 %v186
        %v278 = vpack.c.b16 %v265, %v264
        %v279 = vpack.c.b16 %v267, %v266
        %v280 = vpack.c.b16 %v269, %v268
        %v281 = vpack.c.b16 %v271, %v270
        %v282 = vpack.c.b16 %v273, %v272
        %v283 = vpack.c.b16 %v275, %v274
        %v284 = vpack.c.b16 %v277, %v276
        %vm291 = vcmask 883712
        %v293 = vsel %vm291, %v242, 0
        %v296 = vsel %vm291, %v243, 0
        %v299 = vsel %vm291, %v244, 0
        %v302 = vsel %vm291, %v245, 0
        %v305 = vsel %vm291, %v246, 0
        %v308 = vsel %vm291, %v247, 0
        %v311 = vsel %vm291, %v248, 0
        %v314 = vsel %vm291, %v249, 0
        %vm316 = vcmask 1045504
        %v318 = vsel %vm316, %v284, 0
        %320 = vmatprep.subr.bf16.mxu0 0
        %321 = vmatpush1.bf16.msra.mxu0 %v278
        %322 = vmatprep.subr.bf16.mxu0 0
        %323 = vmatpush1.bf16.msra.mxu0 %v279
        %324 = vmatprep.subr.bf16.mxu0 0
        %325 = vmatpush1.bf16.msra.mxu0 %v280
        %326 = vmatprep.subr.bf16.mxu0 0
        %327 = vmatpush1.bf16.msra.mxu0 %v281
        %328 = vmatprep.subr.bf16.mxu0 0
        %329 = vmatpush1.bf16.msra.mxu0 %v282
        %330 = vmatprep.subr.bf16.mxu0 0
        %331 = vmatpush1.bf16.msra.mxu0 %v283
        %332 = vmatprep.subr.bf16.mxu0 0
        %333 = vmatpush1.bf16.msra.mxu0 %v318
        %334 = vmatprep.subr.bf16.mxu0 0
        %335 = vmatpush1.bf16.msra.mxu0 0
        %336 = vmatprep.subr.bf16.mxu0 0
        %337 = vmatpush1.bf16.msra.mxu0 0
        %338 = vmatprep.subr.bf16.mxu0 0
        %339 = vmatpush1.bf16.msra.mxu0 0
        %340 = vmatprep.subr.bf16.mxu0 0
        %341 = vmatpush1.bf16.msra.mxu0 0
        %342 = vmatprep.subr.bf16.mxu0 0
        %343 = vmatpush1.bf16.msra.mxu0 0
        %344 = vmatprep.subr.bf16.mxu0 0
        %345 = vmatpush1.bf16.msra.mxu0 0
        %346 = vmatprep.subr.bf16.mxu0 0
        %347 = vmatpush1.bf16.msra.mxu0 0
        %348 = vmatprep.subr.bf16.mxu0 0
        %349 = vmatpush1.bf16.msra.mxu0 0
        %350 = vmatprep.subr.bf16.mxu0 0
        %351 = vmatpush1.bf16.msra.mxu0 0
        %352 = vmatprep.mubr.bf16.mxu0 0
        %353 = vmatmul.mubr.bf16.gmra.mrb[0].mxu0 %v293
        %v354 = vpop.f32.mrb[0].mxu0
        %v355 = vadd.f32 %v208, %v354
        %v356 = vpop.f32.mrb[0].mxu0
        %v357 = vpop.f32.mrb[0].mxu0
        %v358 = vadd.f32 %v208, %v357
        %v359 = vpop.f32.mrb[0].mxu0
        %360 = vmatprep.mubr.bf16.mxu0 0
        %361 = vmatmul.mubr.bf16.gmra.mrb[0].mxu0 %v296
        %v362 = vpop.f32.mrb[0].mxu0
        %v363 = vadd.f32 %v208, %v362
        %v364 = vpop.f32.mrb[0].mxu0
        %v365 = vpop.f32.mrb[0].mxu0
        %v366 = vadd.f32 %v208, %v365
        %v367 = vpop.f32.mrb[0].mxu0
        %368 = vmatprep.mubr.bf16.mxu0 0
        %369 = vmatmul.mubr.bf16.gmra.mrb[0].mxu0 %v299
        %v370 = vpop.f32.mrb[0].mxu0
        %v371 = vadd.f32 %v208, %v370
        %v372 = vpop.f32.mrb[0].mxu0
        %v373 = vpop.f32.mrb[0].mxu0
        %v374 = vadd.f32 %v208, %v373
        %v375 = vpop.f32.mrb[0].mxu0
        %376 = vmatprep.mubr.bf16.mxu0 0
        %377 = vmatmul.mubr.bf16.gmra.mrb[0].mxu0 %v302
        %v378 = vpop.f32.mrb[0].mxu0
        %v379 = vadd.f32 %v208, %v378
        %v380 = vpop.f32.mrb[0].mxu0
        %v381 = vpop.f32.mrb[0].mxu0
        %v382 = vadd.f32 %v208, %v381
        %v383 = vpop.f32.mrb[0].mxu0
        %384 = vmatprep.mubr.bf16.mxu0 0
        %385 = vmatmul.mubr.bf16.gmra.mrb[0].mxu0 %v305
        %v386 = vpop.f32.mrb[0].mxu0
        %v387 = vadd.f32 %v208, %v386
        %v388 = vpop.f32.mrb[0].mxu0
        %v389 = vpop.f32.mrb[0].mxu0
        %v390 = vadd.f32 %v208, %v389
        %v391 = vpop.f32.mrb[0].mxu0
        %392 = vmatprep.mubr.bf16.mxu0 0
        %393 = vmatmul.mubr.bf16.gmra.mrb[0].mxu0 %v308
        %v394 = vpop.f32.mrb[0].mxu0
        %v395 = vadd.f32 %v208, %v394
        %v396 = vpop.f32.mrb[0].mxu0
        %v397 = vpop.f32.mrb[0].mxu0
        %v398 = vadd.f32 %v208, %v397
        %v399 = vpop.f32.mrb[0].mxu0
        %400 = vmatprep.mubr.bf16.mxu0 0
        %401 = vmatmul.mubr.bf16.gmra.mrb[0].mxu0 %v311
        %v402 = vpop.f32.mrb[0].mxu0
        %v403 = vadd.f32 %v208, %v402
        %v404 = vpop.f32.mrb[0].mxu0
        %v405 = vpop.f32.mrb[0].mxu0
        %v406 = vadd.f32 %v208, %v405
        %v407 = vpop.f32.mrb[0].mxu0
        %408 = vmatprep.mubr.bf16.mxu0 0
        %409 = vmatmul.mubr.bf16.gmra.mrb[0].mxu0 %v314
        %v410 = vpop.f32.mrb[0].mxu0
        %v411 = vadd.f32 %v208, %v410
        %v412 = vpop.f32.mrb[0].mxu0
        %v413 = vpop.f32.mrb[0].mxu0
        %v414 = vadd.f32 %v208, %v413
        %v415 = vpop.f32.mrb[0].mxu0
        %416 = vdwg.mxu0
        %v417 = vmax.f32 %v355, 0.0
        %v418 = vmax.f32 %v358, 0.0
        %v419 = vmax.f32 %v363, 0.0
        %v420 = vmax.f32 %v366, 0.0
        %v421 = vmax.f32 %v371, 0.0
        %v422 = vmax.f32 %v374, 0.0
        %v423 = vmax.f32 %v379, 0.0
        %v424 = vmax.f32 %v382, 0.0
        %v425 = vmax.f32 %v387, 0.0
        %v426 = vmax.f32 %v390, 0.0
        %v427 = vmax.f32 %v395, 0.0
        %v428 = vmax.f32 %v398, 0.0
        %v429 = vmax.f32 %v403, 0.0
        %v430 = vmax.f32 %v406, 0.0
        %v431 = vmax.f32 %v411, 0.0
        %v432 = vmax.f32 %v414, 0.0
        %433 = vst [vmem:[%s164] sm:$0xff] %v417
        %434 = vst [vmem:[%s164 + $0x8] sm:$0xff] %v418
        %435 = vst [vmem:[%s164 + $0x10] sm:$0xff] %v419
        %436 = vst [vmem:[%s164 + $0x18] sm:$0xff] %v420
        %437 = vst [vmem:[%s164 + $0x20] sm:$0xff] %v421
        %438 = vst [vmem:[%s164 + $0x28] sm:$0xff] %v422
        %439 = vst [vmem:[%s164 + $0x30] sm:$0xff] %v423
        %440 = vst [vmem:[%s164 + $0x38] sm:$0xff] %v424
        %441 = vst [vmem:[%s164 + $0x40] sm:$0xff] %v425
        %442 = vst [vmem:[%s164 + $0x48] sm:$0xff] %v426
        %443 = vst [vmem:[%s164 + $0x50] sm:$0xff] %v427
        %444 = vst [vmem:[%s164 + $0x58] sm:$0xff] %v428
        %445 = vst [vmem:[%s164 + $0x60] sm:$0xff] %v429
        %446 = vst [vmem:[%s164 + $0x68] sm:$0xff] %v430
        %447 = vst [vmem:[%s164 + $0x70] sm:$0xff] %v431
        %448 = vst [vmem:[%s164 + $0x78] sm:$0xff] %v432
        %s449 = scalar_lea.vmem %s169, 64
        %v450 = vld [vmem:[%s449] sm:$0xf]
        %v451 = vld [vmem:[%s449 + $0x4] sm:$0xf]
        %v452 = vld [vmem:[%s449 + $0x8] sm:$0xf]
        %v453 = vld [vmem:[%s449 + $0xc] sm:$0xf]
        %v454 = vld [vmem:[%s449 + $0x10] sm:$0xf]
        %v455 = vld [vmem:[%s449 + $0x14] sm:$0xf]
        %v456 = vld [vmem:[%s449 + $0x18] sm:$0xf]
        %v457 = vld [vmem:[%s449 + $0x1c] sm:$0xf]
        %v458 = vld [vmem:[%s449 + $0x20] sm:$0xf]
        %v459 = vld [vmem:[%s449 + $0x24] sm:$0xf]
        %v460 = vld [vmem:[%s449 + $0x28] sm:$0xf]
        %v461 = vld [vmem:[%s449 + $0x2c] sm:$0xf]
        %v462 = vld [vmem:[%s449 + $0x30] sm:$0xf]
        %v463 = vld [vmem:[%s449 + $0x34] sm:$0xf]
        %v464 = vld [vmem:[%s449 + $0x38] sm:$0xf]
        %v465 = vld [vmem:[%s449 + $0x3c] sm:$0xf]
        %v482 = vunpack.c.l.b16 %v450
        %v483 = vunpack.c.l.b16 %v451
        %v484 = vunpack.c.l.b16 %v452
        %v485 = vunpack.c.l.b16 %v453
        %v486 = vunpack.c.l.b16 %v454
        %v487 = vunpack.c.l.b16 %v455
        %v488 = vunpack.c.l.b16 %v456
        %v489 = vunpack.c.l.b16 %v457
        %v490 = vunpack.c.l.b16 %v458
        %v491 = vunpack.c.l.b16 %v459
        %v492 = vunpack.c.l.b16 %v460
        %v493 = vunpack.c.l.b16 %v461
        %v494 = vunpack.c.l.b16 %v462
        %v495 = vunpack.c.l.b16 %v463
        %v496 = vunpack.c.l.b16 %v464
        %v497 = vunpack.c.l.b16 %v465
        %v498 = vpack.c.b16 %v483, %v482
        %v499 = vpack.c.b16 %v485, %v484
        %v500 = vpack.c.b16 %v487, %v486
        %v501 = vpack.c.b16 %v489, %v488
        %v502 = vpack.c.b16 %v491, %v490
        %v503 = vpack.c.b16 %v493, %v492
        %v504 = vpack.c.b16 %v495, %v494
        %v505 = vpack.c.b16 %v497, %v496
        %v507 = vsel %vm291, %v498, 0
        %v510 = vsel %vm291, %v499, 0
        %v513 = vsel %vm291, %v500, 0
        %v516 = vsel %vm291, %v501, 0
        %v519 = vsel %vm291, %v502, 0
        %v522 = vsel %vm291, %v503, 0
        %v525 = vsel %vm291, %v504, 0
        %v528 = vsel %vm291, %v505, 0
        %530 = vmatprep.subr.bf16.mxu0 0
        %531 = vmatpush1.bf16.msra.mxu0 %v278
        %532 = vmatprep.subr.bf16.mxu0 0
        %533 = vmatpush1.bf16.msra.mxu0 %v279
        %534 = vmatprep.subr.bf16.mxu0 0
        %535 = vmatpush1.bf16.msra.mxu0 %v280
        %536 = vmatprep.subr.bf16.mxu0 0
        %537 = vmatpush1.bf16.msra.mxu0 %v281
        %538 = vmatprep.subr.bf16.mxu0 0
        %539 = vmatpush1.bf16.msra.mxu0 %v282
        %540 = vmatprep.subr.bf16.mxu0 0
        %541 = vmatpush1.bf16.msra.mxu0 %v283
        %542 = vmatprep.subr.bf16.mxu0 0
        %543 = vmatpush1.bf16.msra.mxu0 %v318
        %544 = vmatprep.subr.bf16.mxu0 0
        %545 = vmatpush1.bf16.msra.mxu0 0
        %546 = vmatprep.subr.bf16.mxu0 0
        %547 = vmatpush1.bf16.msra.mxu0 0
        %548 = vmatprep.subr.bf16.mxu0 0
        %549 = vmatpush1.bf16.msra.mxu0 0
        %550 = vmatprep.subr.bf16.mxu0 0
        %551 = vmatpush1.bf16.msra.mxu0 0
        %552 = vmatprep.subr.bf16.mxu0 0
        %553 = vmatpush1.bf16.msra.mxu0 0
        %554 = vmatprep.subr.bf16.mxu0 0
        %555 = vmatpush1.bf16.msra.mxu0 0
        %556 = vmatprep.subr.bf16.mxu0 0
        %557 = vmatpush1.bf16.msra.mxu0 0
        %558 = vmatprep.subr.bf16.mxu0 0
        %559 = vmatpush1.bf16.msra.mxu0 0
        %560 = vmatprep.subr.bf16.mxu0 0
        %561 = vmatpush1.bf16.msra.mxu0 0
        %562 = vmatprep.mubr.bf16.mxu0 0
        %563 = vmatmul.mubr.bf16.gmra.mrb[0].mxu0 %v507
        %v564 = vpop.f32.mrb[0].mxu0
        %v565 = vadd.f32 %v208, %v564
        %v566 = vpop.f32.mrb[0].mxu0
        %v567 = vpop.f32.mrb[0].mxu0
        %v568 = vadd.f32 %v208, %v567
        %v569 = vpop.f32.mrb[0].mxu0
        %570 = vmatprep.mubr.bf16.mxu0 0
        %571 = vmatmul.mubr.bf16.gmra.mrb[0].mxu0 %v510
        %v572 = vpop.f32.mrb[0].mxu0
        %v573 = vadd.f32 %v208, %v572
        %v574 = vpop.f32.mrb[0].mxu0
        %v575 = vpop.f32.mrb[0].mxu0
        %v576 = vadd.f32 %v208, %v575
        %v577 = vpop.f32.mrb[0].mxu0
        %578 = vmatprep.mubr.bf16.mxu0 0
        %579 = vmatmul.mubr.bf16.gmra.mrb[0].mxu0 %v513
        %v580 = vpop.f32.mrb[0].mxu0
        %v581 = vadd.f32 %v208, %v580
        %v582 = vpop.f32.mrb[0].mxu0
        %v583 = vpop.f32.mrb[0].mxu0
        %v584 = vadd.f32 %v208, %v583
        %v585 = vpop.f32.mrb[0].mxu0
        %586 = vmatprep.mubr.bf16.mxu0 0
        %587 = vmatmul.mubr.bf16.gmra.mrb[0].mxu0 %v516
        %v588 = vpop.f32.mrb[0].mxu0
        %v589 = vadd.f32 %v208, %v588
        %v590 = vpop.f32.mrb[0].mxu0
        %v591 = vpop.f32.mrb[0].mxu0
        %v592 = vadd.f32 %v208, %v591
        %v593 = vpop.f32.mrb[0].mxu0
        %594 = vmatprep.mubr.bf16.mxu0 0
        %595 = vmatmul.mubr.bf16.gmra.mrb[0].mxu0 %v519
        %v596 = vpop.f32.mrb[0].mxu0
        %v597 = vadd.f32 %v208, %v596
        %v598 = vpop.f32.mrb[0].mxu0
        %v599 = vpop.f32.mrb[0].mxu0
        %v600 = vadd.f32 %v208, %v599
        %v601 = vpop.f32.mrb[0].mxu0
        %602 = vmatprep.mubr.bf16.mxu0 0
        %603 = vmatmul.mubr.bf16.gmra.mrb[0].mxu0 %v522
        %v604 = vpop.f32.mrb[0].mxu0
        %v605 = vadd.f32 %v208, %v604
        %v606 = vpop.f32.mrb[0].mxu0
        %v607 = vpop.f32.mrb[0].mxu0
        %v608 = vadd.f32 %v208, %v607
        %v609 = vpop.f32.mrb[0].mxu0
        %610 = vmatprep.mubr.bf16.mxu0 0
        %611 = vmatmul.mubr.bf16.gmra.mrb[0].mxu0 %v525
        %v612 = vpop.f32.mrb[0].mxu0
        %v613 = vadd.f32 %v208, %v612
        %v614 = vpop.f32.mrb[0].mxu0
        %v615 = vpop.f32.mrb[0].mxu0
        %v616 = vadd.f32 %v208, %v615
        %v617 = vpop.f32.mrb[0].mxu0
        %618 = vmatprep.mubr.bf16.mxu0 0
        %619 = vmatmul.mubr.bf16.gmra.mrb[0].mxu0 %v528
        %v620 = vpop.f32.mrb[0].mxu0
        %v621 = vadd.f32 %v208, %v620
        %v622 = vpop.f32.mrb[0].mxu0
        %v623 = vpop.f32.mrb[0].mxu0
        %v624 = vadd.f32 %v208, %v623
        %v625 = vpop.f32.mrb[0].mxu0
        %626 = vdwg.mxu0
        %v627 = vmax.f32 %v565, 0.0
        %v628 = vmax.f32 %v568, 0.0
        %v629 = vmax.f32 %v573, 0.0
        %v630 = vmax.f32 %v576, 0.0
        %v631 = vmax.f32 %v581, 0.0
        %v632 = vmax.f32 %v584, 0.0
        %v633 = vmax.f32 %v589, 0.0
        %v634 = vmax.f32 %v592, 0.0
        %v635 = vmax.f32 %v597, 0.0
        %v636 = vmax.f32 %v600, 0.0
        %v637 = vmax.f32 %v605, 0.0
        %v638 = vmax.f32 %v608, 0.0
        %v639 = vmax.f32 %v613, 0.0
        %v640 = vmax.f32 %v616, 0.0
        %v641 = vmax.f32 %v621, 0.0
        %v642 = vmax.f32 %v624, 0.0
        %s643 = scalar_lea.vmem %s164, 128 [#allocation2]
        %644 = vst [vmem:[%s643] sm:$0xff] %v627
        %645 = vst [vmem:[%s643 + $0x8] sm:$0xff] %v628
        %646 = vst [vmem:[%s643 + $0x10] sm:$0xff] %v629
        %647 = vst [vmem:[%s643 + $0x18] sm:$0xff] %v630
        %648 = vst [vmem:[%s643 + $0x20] sm:$0xff] %v631
        %649 = vst [vmem:[%s643 + $0x28] sm:$0xff] %v632
        %650 = vst [vmem:[%s643 + $0x30] sm:$0xff] %v633
        %651 = vst [vmem:[%s643 + $0x38] sm:$0xff] %v634
        %652 = vst [vmem:[%s643 + $0x40] sm:$0xff] %v635
        %653 = vst [vmem:[%s643 + $0x48] sm:$0xff] %v636
        %654 = vst [vmem:[%s643 + $0x50] sm:$0xff] %v637
        %655 = vst [vmem:[%s643 + $0x58] sm:$0xff] %v638
        %656 = vst [vmem:[%s643 + $0x60] sm:$0xff] %v639
        %657 = vst [vmem:[%s643 + $0x68] sm:$0xff] %v640
        %658 = vst [vmem:[%s643 + $0x70] sm:$0xff] %v641
        %659 = vst [vmem:[%s643 + $0x78] sm:$0xff] %v642
        %s660 = sand.u32 %s93, 1
        %s661 = scalar_lea.sflag [#allocation3], %s660
        %s662 = sand.u32 %s93, 1
        %s663 = smul.addr %s662, 256
        %s664 = scalar_lea.vmem [#allocation2], %s663
        // Predicated region
        $region33: #{tpu_custom_call.1} parent=31 // pred_check
          %p665 = pneg %p103
        $region34: #{tpu_custom_call.1} parent=31 // pred_check_branch
          %667 = sbr.rel (%p665) target = $region36
        $region35: #{tpu_custom_call.1} parent=31 // pred_region
          %s668 = smul.u32 32, %s17
          %s670 = ssub.s32 4096, 4096
          %671 = vsyncadd %s661, %s670
          %s672 = smul.addr %s668, 128
          %s673 = scalar_lea.hbm %s3, %s672
          %s674 = sshll.u32 %s664, 4
          %s675 = int_to_ptr.vmem [resolvable:$true] %s674
          %680 = dma.vmem_to_hbm [thread:$0]  %s675, 4096, %s673, %s661, 128, 128, 8
        $region36: #{tpu_custom_call.1} parent=31 // pred_fallthru
          _
      $region32: #{tpu_custom_call.1} parent=5 // pred_fallthru
        _
      %p681 = scmp.le.s32.totalorder 2, %s12
      // Predicated region
      $region37: #{tpu_custom_call.1} parent=5 // pred_check
        %p682 = pneg %p681
      $region38: #{tpu_custom_call.1} parent=5 // pred_check_branch
        %684 = sbr.rel (%p682) target = $region40
      $region39: #{tpu_custom_call.1} parent=5 // pred_region
        %s685 = ssub.s32 %s12, 2
        // Predicated region
        $region41: #{tpu_custom_call.1} parent=39 // pred_check
          %p686 = pneg %p109
        $region42: #{tpu_custom_call.1} parent=39 // pred_check_branch
          %688 = sbr.rel (%p686) target = $region44
        $region43: #{tpu_custom_call.1} parent=39 // pred_region
          %s689 = sand.u32 %s94, 1
          %s690 = scalar_lea.sflag [#allocation3], %s689
          %s691 = sand.u32 %s94, 1
          %s692 = smul.addr %s691, 256
          %s693 = scalar_lea.vmem [#allocation2], %s692
          %694 = dma.done %s690, 4096
        $region44: #{tpu_custom_call.1} parent=39 // pred_fallthru
          _
      $region40: #{tpu_custom_call.1} parent=5 // pred_fallthru
        _
    $region6: #{tpu_custom_call.1} parent=1 // loop_footer
      %s16 = sadd.s32 1, %s12
    $region7: #{tpu_custom_call.1} parent=1 // loop_footer_branch
      %11 = sbr.rel target = $region3
    $region8: #{tpu_custom_call.1} parent=1 // loop_exit
      _
    %695 = vsyncpa [#allocation3], 1
    %s696 = scalar_lea.sflag [#allocation3], 1
    %697 = vsyncpa %s696, 1

</llo_original>
